<compile_context>
chip_gen: v6e
topology: v6e:2x2x1
jax: 0.10.0
libtpu: 0.0.40
codegen_flags: <defaults>
</compile_context>

<pallas_src>
import jax
import jax.numpy as jnp
from jax.experimental import pallas as pl
from jax.experimental.pallas import tpu as pltpu


HIDDEN = 40        # MLP hidden width from the PyTorch module
LANE_PAD = 128     # lane-dense padding for hidden / weight columns
BIAS_ROWS = 8      # sublane-aligned bias block appended to the parameter slab


def _round_up(n, m):
    return ((n + m - 1) // m) * m


def _choose_tile_b(B, max_tile=2048, min_tiles=2):
    """Pick a sublane-aligned batch tile from B (not the other way around).

    Targets: big tiles (overhead amortization), >=2 tiles when B allows
    (v7x dual-TC occupancy), and minimal ragged-tail waste.
    """
    b8 = _round_up(max(B, 1), 8)
    if b8 <= 8:
        return 8
    n_tiles = max(min_tiles, pl.cdiv(B, max_tile))
    return min(_round_up(pl.cdiv(B, n_tiles), 8), b8)


def state_decoder_kernel(x_ref, p_ref, o_ref):
    """One batch tile of the 3-layer MLP; all operands stay in VMEM/vregs."""
    in_w = x_ref.shape[1]            # (padded) input feature width = W1 rows
    r1 = in_w                        # end of W1 rows
    r2 = r1 + LANE_PAD               # end of W2 rows
    r3 = r2 + LANE_PAD               # end of W3 rows; bias block lives below
    n_out = o_ref.shape[1]

    # Static slices of the resident parameter slab (zero runtime cost).
    w1 = p_ref[0:r1, :]
    w2 = p_ref[r1:r2, :]
    w3 = p_ref[r2:r3, :]
    bias = p_ref[r3:r3 + BIAS_ROWS, :]          # one aligned (8,128) f32 tile
    b1 = bias[0:1, :]
    b2 = bias[1:2, :]
    b3 = bias[2:3, :]

    x = x_ref[...].astype(jnp.float32)

    # Layer 1: Linear + ReLU (MXU matmul, f32 accumulate).
    h = jnp.dot(x, w1, preferred_element_type=jnp.float32) + b1
    h = jnp.maximum(h, 0.0)

    # Layer 2: Linear + ReLU.
    h = jnp.dot(h, w2, preferred_element_type=jnp.float32) + b2
    h = jnp.maximum(h, 0.0)

    # Layer 3: Linear (no activation).
    y = jnp.dot(h, w3, preferred_element_type=jnp.float32) + b3

    # Store only the real output columns (narrow out block => ~14x fewer
    # HBM write bytes than a 128-lane padded store, and no post-call slice).
    o_ref[...] = y[:, :n_out].astype(o_ref.dtype)


def pack_params(params):
    """Pack w1,b1,w2,b2,w3,b3 into one lane-dense f32 slab.

    Row layout:
      [0,             in_pad)        : W1, zero-padded to (in_pad, 128)
      [in_pad,        in_pad+128)    : W2, zero-padded to (128, 128)
      [in_pad+128,    in_pad+256)    : W3, zero-padded to (128, 128)
      [in_pad+256,    in_pad+256+8)  : biases (row 0=b1, 1=b2, 2=b3)
    """
    w1, b1 = params["w1"], params["b1"]   # (vf, 40), (40,)
    w2, b2 = params["w2"], params["b2"]   # (40, 40), (40,)
    w3, b3 = params["w3"], params["b3"]   # (40, n_out), (n_out,)
    vf, hidden = w1.shape
    n_out = w3.shape[1]
    in_pad = _round_up(vf, 8)             # sublane-align the W1 block

    def pad_w(w, rows):
        out = jnp.zeros((rows, LANE_PAD), jnp.float32)
        return out.at[: w.shape[0], : w.shape[1]].set(w.astype(jnp.float32))

    bias_blk = jnp.zeros((BIAS_ROWS, LANE_PAD), jnp.float32)
    bias_blk = (bias_blk.at[0, :hidden].set(b1.astype(jnp.float32))
                        .at[1, :hidden].set(b2.astype(jnp.float32))
                        .at[2, :n_out].set(b3.astype(jnp.float32)))

    slab = jnp.concatenate(
        [pad_w(w1, in_pad), pad_w(w2, LANE_PAD), pad_w(w3, LANE_PAD), bias_blk],
        axis=0)
    return slab, in_pad


def state_decoder_forward(x, params, *, max_tile_b=2048, min_batch_tiles=2):
    """x: (B, visual_features) f32. Returns (B, n_state_obs) f32."""
    B, vf = x.shape
    hidden = params["w1"].shape[1]
    n_out = params["w3"].shape[1]
    assert hidden <= LANE_PAD and n_out <= LANE_PAD

    slab, in_pad = pack_params(params)

    # Batch dim is never padded/copied (the cdiv grid handles the ragged
    # tail); only pad the tiny feature dim if it is not sublane-aligned.
    if vf != in_pad:
        x = jnp.pad(x, ((0, 0), (0, in_pad - vf)))

    tile_b = _choose_tile_b(B, max_tile=max_tile_b, min_tiles=min_batch_tiles)
    grid = (pl.cdiv(B, tile_b),)

    flops = 2 * B * (vf * hidden + hidden * hidden + hidden * n_out)
    bytes_accessed = (B * in_pad * 4          # input read
                      + slab.size * 4         # parameter slab (read once)
                      + B * n_out * 4)        # output write (dominant at big B)

    out = pl.pallas_call(
        state_decoder_kernel,
        out_shape=jax.ShapeDtypeStruct((B, n_out), x.dtype),
        grid=grid,
        in_specs=[
            pl.BlockSpec((tile_b, in_pad), lambda i: (i, 0)),
            # Whole parameter slab, constant block index -> DMA'd once,
            # then stays VMEM-resident across batch tiles.
            pl.BlockSpec(slab.shape, lambda i: (0, 0)),
        ],
        # Narrow output block: last dim == full array dim (n_out).
        out_specs=pl.BlockSpec((tile_b, n_out), lambda i: (i, 0)),
        compiler_params=pltpu.CompilerParams(
            dimension_semantics=("parallel",)),
        cost_estimate=pl.CostEstimate(
            flops=flops, transcendentals=0, bytes_accessed=bytes_accessed),
    )(x, slab)

    return out


def init_params(key, visual_features, n_state_obs, hidden=HIDDEN):
    """Deterministic synthetic init (nn.Linear shapes, stored as (in, out))."""
    ks = jax.random.split(key, 6)

    def lin(kw, kb, fan_in, fan_out):
        bound = 1.0 / jnp.sqrt(fan_in)
        w = jax.random.uniform(kw, (fan_in, fan_out), jnp.float32, -bound, bound)
        b = jax.random.uniform(kb, (fan_out,), jnp.float32, -bound, bound)
        return w, b

    w1, b1 = lin(ks[0], ks[1], visual_features, hidden)
    w2, b2 = lin(ks[2], ks[3], hidden, hidden)
    w3, b3 = lin(ks[4], ks[5], hidden, n_state_obs)
    return {"w1": w1, "b1": b1, "w2": w2, "b2": b2, "w3": w3, "b3": b3}


def reference_forward(x, p):
    h = jnp.maximum(x @ p["w1"] + p["b1"], 0.0)
    h = jnp.maximum(h @ p["w2"] + p["b2"], 0.0)
    return h @ p["w3"] + p["b3"]


if __name__ == "__main__":
    key = jax.random.PRNGKey(0)
    visual_features = 32
    n_state_obs = 9

    k_x, k_p, k_x2 = jax.random.split(key, 3)
    params = init_params(k_p, visual_features, n_state_obs)

    # Small single-tile case.
    batch = 8
    x = jax.random.normal(k_x, (batch, visual_features), dtype=jnp.float32)
    out = jax.block_until_ready(state_decoder_forward(x, params))
    ref = reference_forward(x, params)
    assert out.shape == (batch, n_state_obs)
    assert jnp.allclose(out, ref, atol=1e-4, rtol=1e-4)

    # Ragged multi-tile case: exercises the cdiv batch grid + boundary masking
    # of the partial last tile (no wrapper-side batch padding or post-slice).
    batch2 = 600
    x2 = jax.random.normal(k_x2, (batch2, visual_features), dtype=jnp.float32)
    out2 = jax.block_until_ready(state_decoder_forward(x2, params))
    ref2 = reference_forward(x2, params)
    assert out2.shape == (batch2, n_state_obs)
    assert jnp.allclose(out2, ref2, atol=1e-4, rtol=1e-4)

    print("KERNEL_OK")
</pallas_src>

<mosaic_0001>
module attributes {stable_mosaic.version = 11 : i64} {
  func.func @state_decoder_kernel(%arg0: i32, %arg1: memref<8x32xf32, #tpu.memory_space<vmem>>, %arg2: memref<296x128xf32, #tpu.memory_space<vmem>>, %arg3: memref<8x9xf32, #tpu.memory_space<vmem>>) attributes {dimension_semantics = [#tpu.dimension_semantics<parallel>], iteration_bounds = array<i64: 1>, scalar_prefetch = 0 : i64, scratch_operands = 0 : i64, tpu.core_type = #tpu.core_type<tc>, window_params = [{transform_indices = @transform_0, window_bounds = array<i64: 8, 32>}, {pipeline_mode = #tpu.pipeline_mode<synchronous>, transform_indices = @transform_1, window_bounds = array<i64: 296, 128>}, {transform_indices = @transform_2, window_bounds = array<i64: 8, 9>}]} {
    %c0 = arith.constant 0 : index
    %c0_0 = arith.constant 0 : index
    %0 = vector.load %arg2[%c0, %c0_0] : memref<296x128xf32, #tpu.memory_space<vmem>>, vector<32x128xf32>
    %c32 = arith.constant 32 : index
    %c0_1 = arith.constant 0 : index
    %1 = vector.load %arg2[%c32, %c0_1] : memref<296x128xf32, #tpu.memory_space<vmem>>, vector<128x128xf32>
    %c160 = arith.constant 160 : index
    %c0_2 = arith.constant 0 : index
    %2 = vector.load %arg2[%c160, %c0_2] : memref<296x128xf32, #tpu.memory_space<vmem>>, vector<128x128xf32>
    %c288 = arith.constant 288 : index
    %c0_3 = arith.constant 0 : index
    %3 = vector.load %arg2[%c288, %c0_3] : memref<296x128xf32, #tpu.memory_space<vmem>>, vector<8x128xf32>
    %4 = vector.extract_strided_slice %3 {offsets = [0, 0], sizes = [1, 128], strides = [1, 1]} : vector<8x128xf32> to vector<1x128xf32>
    %5 = vector.extract_strided_slice %3 {offsets = [1, 0], sizes = [1, 128], strides = [1, 1]} : vector<8x128xf32> to vector<1x128xf32>
    %6 = vector.extract_strided_slice %3 {offsets = [2, 0], sizes = [1, 128], strides = [1, 1]} : vector<8x128xf32> to vector<1x128xf32>
    %c0_4 = arith.constant 0 : index
    %c0_5 = arith.constant 0 : index
    %7 = vector.load %arg1[%c0_4, %c0_5] : memref<8x32xf32, #tpu.memory_space<vmem>>, vector<8x32xf32>
    %cst = arith.constant dense<0.000000e+00> : vector<8x128xf32>
    %8 = tpu.matmul %7, %0, %cst {dimension_numbers = #tpu.dot_dimension_numbers<[1], [0], [0], [1], [0, 0, 1, 1], [], []>} : vector<8x32xf32>, vector<32x128xf32>, vector<8x128xf32> -> vector<8x128xf32>
    %9 = vector.broadcast %4 : vector<1x128xf32> to vector<8x128xf32>
    %10 = arith.addf %8, %9 : vector<8x128xf32>
    %cst_6 = arith.constant 0.000000e+00 : f32
    %11 = vector.broadcast %cst_6 : f32 to vector<8x128xf32>
    %12 = arith.maximumf %10, %11 : vector<8x128xf32>
    %cst_7 = arith.constant dense<0.000000e+00> : vector<8x128xf32>
    %13 = tpu.matmul %12, %1, %cst_7 {dimension_numbers = #tpu.dot_dimension_numbers<[1], [0], [0], [1], [0, 0, 1, 1], [], []>} : vector<8x128xf32>, vector<128x128xf32>, vector<8x128xf32> -> vector<8x128xf32>
    %14 = vector.broadcast %5 : vector<1x128xf32> to vector<8x128xf32>
    %15 = arith.addf %13, %14 : vector<8x128xf32>
    %cst_8 = arith.constant 0.000000e+00 : f32
    %16 = vector.broadcast %cst_8 : f32 to vector<8x128xf32>
    %17 = arith.maximumf %15, %16 : vector<8x128xf32>
    %cst_9 = arith.constant dense<0.000000e+00> : vector<8x128xf32>
    %18 = tpu.matmul %17, %2, %cst_9 {dimension_numbers = #tpu.dot_dimension_numbers<[1], [0], [0], [1], [0, 0, 1, 1], [], []>} : vector<8x128xf32>, vector<128x128xf32>, vector<8x128xf32> -> vector<8x128xf32>
    %19 = vector.broadcast %6 : vector<1x128xf32> to vector<8x128xf32>
    %20 = arith.addf %18, %19 : vector<8x128xf32>
    %21 = vector.extract_strided_slice %20 {offsets = [0, 0], sizes = [8, 9], strides = [1, 1]} : vector<8x128xf32> to vector<8x9xf32>
    %c0_10 = arith.constant 0 : index
    %c0_11 = arith.constant 0 : index
    %22 = vector.load %arg3[%c0_10, %c0_11] : memref<8x9xf32, #tpu.memory_space<vmem>>, vector<8x9xf32>
    tpu.vector_store %arg3[%c0_10, %c0_11], %21 {strides = array<i32>} : memref<8x9xf32, #tpu.memory_space<vmem>>, vector<8x9xf32>,
    return
  }
  func.func @transform_0(%arg0: i32) -> (i32, i32) {
    %c0_i32 = arith.constant 0 : i32
    %c0_i32_0 = arith.constant 0 : i32
    return %arg0, %c0_i32 : i32, i32
  }
  func.func @transform_1(%arg0: i32) -> (i32, i32) {
    %c0_i32 = arith.constant 0 : i32
    %c0_i32_0 = arith.constant 0 : i32
    %c0_i32_1 = arith.constant 0 : i32
    return %c0_i32, %c0_i32_0 : i32, i32
  }
  func.func @transform_2(%arg0: i32) -> (i32, i32) {
    %c0_i32 = arith.constant 0 : i32
    %c0_i32_0 = arith.constant 0 : i32
    return %arg0, %c0_i32 : i32, i32
  }
}

</mosaic_0001>

<llo_original>
// kernel: tpu_custom_call.1
$region0: #{tpu_custom_call.1}
  #allocation0 [shape = 'u32[]', space=smem, size = 0x4, offset = 0x4, fixed_abs, tag = 'smem constant byte address 0x4 - core index']
  #allocation1 [shape = 'u32[144,128]{1,0:T(1,128)}', space=vmem, size = 0x12000, scoped, tag = 'internal scratch']
  %s0 = inlined_call_operand.hbm [shape: f32[8,32], index: 0, kind: input, shape index: {}]
  %s1 = inlined_call_operand.hbm [shape: f32[296,128], index: 1, kind: input, shape index: {}]
  %s2 = inlined_call_operand.hbm [shape: f32[8,9], index: 2, kind: output, shape index: {}]
  %s3 = sld [smem:[#allocation0]]
  $region26: #{tpu_custom_call.1} parent=0
    _
  %s5 = ssub.s32 1, %s3
  %s6 = scalar_select 0, %s5, %s3
  $region1: #{tpu_custom_call.1} parent=0
    #allocation2 [shape = 'u8[4096]{0}', space=vmem, size = 0x1000, scoped, tag = 'input window, operand 0, single buffered']
    #allocation3 [shape = 's32[1]{0}', space=sflag, size = 0x4, scoped, tag = 'scoped memory for tpu_custom_call.1']
    #allocation4 [shape = 's32[1]{0}', space=sflag, size = 0x4, scoped, tag = 'scoped memory for tpu_custom_call.1']
    #allocation5 [shape = 'u8[151552]{0}', space=vmem, size = 0x25000, scoped, tag = 'input window, operand 1, single buffered']
    #allocation6 [shape = 's32[1]{0}', space=sflag, size = 0x4, scoped, tag = 'scoped memory for tpu_custom_call.1']
    #allocation7 [shape = 'u8[4096]{0}', space=vmem, size = 0x1000, scoped, tag = 'output window, operand 0, single buffered']
    %7 = vsyncpa [#allocation3], 0
    %8 = vsyncpa [#allocation6], 0
    %9 = vsyncpa [#allocation4], 0
    // Predicated region
    $region2: #{tpu_custom_call.1} parent=1 // pred_check
      _
    $region3: #{tpu_custom_call.1} parent=1 // pred_check_branch
      %11 = sbr.rel (0) target = $region5
    $region4: #{tpu_custom_call.1} parent=1 // pred_region
      %s13 = ssub.s32 128, 128
      %14 = vsyncadd [#allocation3], %s13
      %s16 = sshll.u32 [#allocation2], 4
      %s17 = int_to_ptr.vmem [resolvable:$true] %s16
      %19 = dma.hbm_to_vmem [thread:$0]  %s0, 128, %s17, [#allocation3]
    $region5: #{tpu_custom_call.1} parent=1 // pred_fallthru
      _
    // Predicated region
    $region6: #{tpu_custom_call.1} parent=1 // pred_check
      _
    $region7: #{tpu_custom_call.1} parent=1 // pred_check_branch
      %21 = sbr.rel (0) target = $region9
    $region8: #{tpu_custom_call.1} parent=1 // pred_region
      %s23 = ssub.s32 4736, 4736
      %24 = vsyncadd [#allocation6], %s23
      %s25 = sshll.u32 [#allocation5], 4
      %s26 = int_to_ptr.vmem [resolvable:$true] %s25
      %31 = dma.hbm_to_vmem [thread:$0]  %s1, 4736, %s26, [#allocation6], 128, 128, 8
    $region9: #{tpu_custom_call.1} parent=1 // pred_fallthru
      _
    // Predicated region
    $region10: #{tpu_custom_call.1} parent=1 // pred_check
      _
    $region11: #{tpu_custom_call.1} parent=1 // pred_check_branch
      %33 = sbr.rel (0) target = $region13
    $region12: #{tpu_custom_call.1} parent=1 // pred_region
      %34 = dma.done [#allocation3], 128
    $region13: #{tpu_custom_call.1} parent=1 // pred_fallthru
      _
    // Predicated region
    $region14: #{tpu_custom_call.1} parent=1 // pred_check
      _
    $region15: #{tpu_custom_call.1} parent=1 // pred_check_branch
      %36 = sbr.rel (0) target = $region17
    $region16: #{tpu_custom_call.1} parent=1 // pred_region
      %37 = dma.done [#allocation6], 4736
    $region17: #{tpu_custom_call.1} parent=1 // pred_fallthru
      _
    %v38 = vld [vmem:[#allocation5] sm:$0xff]
    %v39 = vld [vmem:[#allocation5 + $0x8] sm:$0xff]
    %v40 = vld [vmem:[#allocation5 + $0x10] sm:$0xff]
    %v41 = vld [vmem:[#allocation5 + $0x18] sm:$0xff]
    %v42 = vld [vmem:[#allocation5 + $0x20] sm:$0xff]
    %v43 = vld [vmem:[#allocation5 + $0x28] sm:$0xff]
    %v44 = vld [vmem:[#allocation5 + $0x30] sm:$0xff]
    %v45 = vld [vmem:[#allocation5 + $0x38] sm:$0xff]
    %v46 = vld [vmem:[#allocation5 + $0x40] sm:$0xff]
    %v47 = vld [vmem:[#allocation5 + $0x48] sm:$0xff]
    %v48 = vld [vmem:[#allocation5 + $0x50] sm:$0xff]
    %v49 = vld [vmem:[#allocation5 + $0x58] sm:$0xff]
    %v50 = vld [vmem:[#allocation5 + $0x60] sm:$0xff]
    %v51 = vld [vmem:[#allocation5 + $0x68] sm:$0xff]
    %v52 = vld [vmem:[#allocation5 + $0x70] sm:$0xff]
    %v53 = vld [vmem:[#allocation5 + $0x78] sm:$0xff]
    %v54 = vld [vmem:[#allocation5 + $0x80] sm:$0xff]
    %v55 = vld [vmem:[#allocation5 + $0x88] sm:$0xff]
    %v56 = vld [vmem:[#allocation5 + $0x90] sm:$0xff]
    %v57 = vld [vmem:[#allocation5 + $0x98] sm:$0xff]
    %v58 = vld [vmem:[#allocation5 + $0xa0] sm:$0xff]
    %v59 = vld [vmem:[#allocation5 + $0xa8] sm:$0xff]
    %v60 = vld [vmem:[#allocation5 + $0xb0] sm:$0xff]
    %v61 = vld [vmem:[#allocation5 + $0xb8] sm:$0xff]
    %v62 = vld [vmem:[#allocation5 + $0xc0] sm:$0xff]
    %v63 = vld [vmem:[#allocation5 + $0xc8] sm:$0xff]
    %v64 = vld [vmem:[#allocation5 + $0xd0] sm:$0xff]
    %v65 = vld [vmem:[#allocation5 + $0xd8] sm:$0xff]
    %v66 = vld [vmem:[#allocation5 + $0xe0] sm:$0xff]
    %v67 = vld [vmem:[#allocation5 + $0xe8] sm:$0xff]
    %v68 = vld [vmem:[#allocation5 + $0xf0] sm:$0xff]
    %v69 = vld [vmem:[#allocation5 + $0xf8] sm:$0xff]
    %v70 = vld [vmem:[#allocation5 + $0x100] sm:$0xff]
    %v71 = vld [vmem:[#allocation5 + $0x108] sm:$0xff]
    %v72 = vld [vmem:[#allocation5 + $0x110] sm:$0xff]
    %v73 = vld [vmem:[#allocation5 + $0x118] sm:$0xff]
    %v74 = vld [vmem:[#allocation5 + $0x120] sm:$0xff]
    %v75 = vld [vmem:[#allocation2] sm:$0xff]
    %v76 = vlaneseq
    %v77 = vshrl.u32 %v76, 7
    %v78 = vsub.s32 0, %v77
    %v79 = vrot.slane %v74, %v78
    %vm80 = vcmask 261120
    %v82 = vsel %vm80, %v75, 0
    %84 = vmatprep.subr.mxu0 0.0
    %85 = vmatpush1.msra.mxu0 0.0
    %86 = vmatprep.subr.mxu0 0.0
    %87 = vmatpush1.msra.mxu0 0.0
    %88 = vmatprep.subr.mxu0 0.0
    %89 = vmatpush1.msra.mxu0 0.0
    %90 = vmatprep.subr.mxu0 0.0
    %91 = vmatpush1.msra.mxu0 0.0
    %92 = vmatprep.subr.mxu0 0.0
    %93 = vmatpush1.msra.mxu0 0.0
    %94 = vmatprep.subr.mxu0 0.0
    %95 = vmatpush1.msra.mxu0 0.0
    %96 = vmatprep.subr.mxu0 0.0
    %97 = vmatpush1.msra.mxu0 0.0
    %98 = vmatprep.subr.mxu0 0.0
    %99 = vmatpush1.msra.mxu0 0.0
    %100 = vmatprep.subr.mxu0 0.0
    %101 = vmatpush1.msra.mxu0 0.0
    %102 = vmatprep.subr.mxu0 0.0
    %103 = vmatpush1.msra.mxu0 0.0
    %104 = vmatprep.subr.mxu0 0.0
    %105 = vmatpush1.msra.mxu0 0.0
    %106 = vmatprep.subr.mxu0 0.0
    %107 = vmatpush1.msra.mxu0 0.0
    %108 = vmatprep.subr.mxu0 0.0
    %109 = vmatpush1.msra.mxu0 %v41
    %110 = vmatprep.subr.mxu0 0.0
    %111 = vmatpush1.msra.mxu0 %v40
    %112 = vmatprep.subr.mxu0 0.0
    %113 = vmatpush1.msra.mxu0 %v39
    %114 = vmatprep.subr.mxu0 0.0
    %115 = vmatpush1.msra.mxu0 %v38
    %116 = vmatprep.subr.mxu0 0.0
    %117 = vmatpush2.msra.mxu0 0.0
    %118 = vmatprep.subr.mxu0 0.0
    %119 = vmatpush2.msra.mxu0 0.0
    %120 = vmatprep.subr.mxu0 0.0
    %121 = vmatpush2.msra.mxu0 0.0
    %122 = vmatprep.subr.mxu0 0.0
    %123 = vmatpush2.msra.mxu0 0.0
    %124 = vmatprep.subr.mxu0 0.0
    %125 = vmatpush2.msra.mxu0 0.0
    %126 = vmatprep.subr.mxu0 0.0
    %127 = vmatpush2.msra.mxu0 0.0
    %128 = vmatprep.subr.mxu0 0.0
    %129 = vmatpush2.msra.mxu0 0.0
    %130 = vmatprep.subr.mxu0 0.0
    %131 = vmatpush2.msra.mxu0 0.0
    %132 = vmatprep.subr.mxu0 0.0
    %133 = vmatpush2.msra.mxu0 0.0
    %134 = vmatprep.subr.mxu0 0.0
    %135 = vmatpush2.msra.mxu0 0.0
    %136 = vmatprep.subr.mxu0 0.0
    %137 = vmatpush2.msra.mxu0 0.0
    %138 = vmatprep.subr.mxu0 0.0
    %139 = vmatpush2.msra.mxu0 0.0
    %140 = vmatprep.subr.mxu0 0.0
    %141 = vmatpush2.msra.mxu0 0.0
    %142 = vmatprep.subr.mxu0 0.0
    %143 = vmatpush2.msra.mxu0 0.0
    %144 = vmatprep.subr.mxu0 0.0
    %145 = vmatpush2.msra.mxu0 0.0
    %146 = vmatprep.subr.mxu0 0.0
    %147 = vmatpush2.msra.mxu0 0.0
    %148 = vmatprep.mubr.f32.mxu0 0.0
    %149 = vmatmul.mubr.f32.gmra.mxu0 %v82
    %v150 = vpop.f32.mrf.mxu0
    %v151 = vadd.f32 %v79, %v150
    %v152 = vpop.f32.mrf.mxu0
    %153 = vdwg.mxu0
    %v154 = vmax.f32 %v151, 0.0
    %v155 = vlaneseq
    %v156 = vshrl.u32 %v155, 7
    %v157 = vsub.s32 1, %v156
    %v158 = vrot.slane %v74, %v157
    %159 = vmatprep.subr.mxu0 0.0
    %160 = vmatpush1.msra.mxu0 %v57
    %161 = vmatprep.subr.mxu0 0.0
    %162 = vmatpush1.msra.mxu0 %v56
    %163 = vmatprep.subr.mxu0 0.0
    %164 = vmatpush1.msra.mxu0 %v55
    %165 = vmatprep.subr.mxu0 0.0
    %166 = vmatpush1.msra.mxu0 %v54
    %167 = vmatprep.subr.mxu0 0.0
    %168 = vmatpush1.msra.mxu0 %v53
    %169 = vmatprep.subr.mxu0 0.0
    %170 = vmatpush1.msra.mxu0 %v52
    %171 = vmatprep.subr.mxu0 0.0
    %172 = vmatpush1.msra.mxu0 %v51
    %173 = vmatprep.subr.mxu0 0.0
    %174 = vmatpush1.msra.mxu0 %v50
    %175 = vmatprep.subr.mxu0 0.0
    %176 = vmatpush1.msra.mxu0 %v49
    %177 = vmatprep.subr.mxu0 0.0
    %178 = vmatpush1.msra.mxu0 %v48
    %179 = vmatprep.subr.mxu0 0.0
    %180 = vmatpush1.msra.mxu0 %v47
    %181 = vmatprep.subr.mxu0 0.0
    %182 = vmatpush1.msra.mxu0 %v46
    %183 = vmatprep.subr.mxu0 0.0
    %184 = vmatpush1.msra.mxu0 %v45
    %185 = vmatprep.subr.mxu0 0.0
    %186 = vmatpush1.msra.mxu0 %v44
    %187 = vmatprep.subr.mxu0 0.0
    %188 = vmatpush1.msra.mxu0 %v43
    %189 = vmatprep.subr.mxu0 0.0
    %190 = vmatpush1.msra.mxu0 %v42
    %191 = vmatprep.subr.mxu0 0.0
    %192 = vmatpush2.msra.mxu0 0.0
    %193 = vmatprep.subr.mxu0 0.0
    %194 = vmatpush2.msra.mxu0 0.0
    %195 = vmatprep.subr.mxu0 0.0
    %196 = vmatpush2.msra.mxu0 0.0
    %197 = vmatprep.subr.mxu0 0.0
    %198 = vmatpush2.msra.mxu0 0.0
    %199 = vmatprep.subr.mxu0 0.0
    %200 = vmatpush2.msra.mxu0 0.0
    %201 = vmatprep.subr.mxu0 0.0
    %202 = vmatpush2.msra.mxu0 0.0
    %203 = vmatprep.subr.mxu0 0.0
    %204 = vmatpush2.msra.mxu0 0.0
    %205 = vmatprep.subr.mxu0 0.0
    %206 = vmatpush2.msra.mxu0 0.0
    %207 = vmatprep.subr.mxu0 0.0
    %208 = vmatpush2.msra.mxu0 0.0
    %209 = vmatprep.subr.mxu0 0.0
    %210 = vmatpush2.msra.mxu0 0.0
    %211 = vmatprep.subr.mxu0 0.0
    %212 = vmatpush2.msra.mxu0 0.0
    %213 = vmatprep.subr.mxu0 0.0
    %214 = vmatpush2.msra.mxu0 0.0
    %215 = vmatprep.subr.mxu0 0.0
    %216 = vmatpush2.msra.mxu0 0.0
    %217 = vmatprep.subr.mxu0 0.0
    %218 = vmatpush2.msra.mxu0 0.0
    %219 = vmatprep.subr.mxu0 0.0
    %220 = vmatpush2.msra.mxu0 0.0
    %221 = vmatprep.subr.mxu0 0.0
    %222 = vmatpush2.msra.mxu0 0.0
    %223 = vmatprep.mubr.f32.mxu0 0.0
    %224 = vmatmul.mubr.f32.gmra.mxu0 %v154
    %v225 = vpop.f32.mrf.mxu0
    %v226 = vadd.f32 %v158, %v225
    %v227 = vpop.f32.mrf.mxu0
    %228 = vdwg.mxu0
    %v229 = vmax.f32 %v226, 0.0
    %v230 = vlaneseq
    %v231 = vshrl.u32 %v230, 7
    %v232 = vsub.s32 2, %v231
    %v233 = vrot.slane %v74, %v232
    %234 = vmatprep.subr.mxu0 0.0
    %235 = vmatpush1.msra.mxu0 %v73
    %236 = vmatprep.subr.mxu0 0.0
    %237 = vmatpush1.msra.mxu0 %v72
    %238 = vmatprep.subr.mxu0 0.0
    %239 = vmatpush1.msra.mxu0 %v71
    %240 = vmatprep.subr.mxu0 0.0
    %241 = vmatpush1.msra.mxu0 %v70
    %242 = vmatprep.subr.mxu0 0.0
    %243 = vmatpush1.msra.mxu0 %v69
    %244 = vmatprep.subr.mxu0 0.0
    %245 = vmatpush1.msra.mxu0 %v68
    %246 = vmatprep.subr.mxu0 0.0
    %247 = vmatpush1.msra.mxu0 %v67
    %248 = vmatprep.subr.mxu0 0.0
    %249 = vmatpush1.msra.mxu0 %v66
    %250 = vmatprep.subr.mxu0 0.0
    %251 = vmatpush1.msra.mxu0 %v65
    %252 = vmatprep.subr.mxu0 0.0
    %253 = vmatpush1.msra.mxu0 %v64
    %254 = vmatprep.subr.mxu0 0.0
    %255 = vmatpush1.msra.mxu0 %v63
    %256 = vmatprep.subr.mxu0 0.0
    %257 = vmatpush1.msra.mxu0 %v62
    %258 = vmatprep.subr.mxu0 0.0
    %259 = vmatpush1.msra.mxu0 %v61
    %260 = vmatprep.subr.mxu0 0.0
    %261 = vmatpush1.msra.mxu0 %v60
    %262 = vmatprep.subr.mxu0 0.0
    %263 = vmatpush1.msra.mxu0 %v59
    %264 = vmatprep.subr.mxu0 0.0
    %265 = vmatpush1.msra.mxu0 %v58
    %266 = vmatprep.subr.mxu0 0.0
    %267 = vmatpush2.msra.mxu0 0.0
    %268 = vmatprep.subr.mxu0 0.0
    %269 = vmatpush2.msra.mxu0 0.0
    %270 = vmatprep.subr.mxu0 0.0
    %271 = vmatpush2.msra.mxu0 0.0
    %272 = vmatprep.subr.mxu0 0.0
    %273 = vmatpush2.msra.mxu0 0.0
    %274 = vmatprep.subr.mxu0 0.0
    %275 = vmatpush2.msra.mxu0 0.0
    %276 = vmatprep.subr.mxu0 0.0
    %277 = vmatpush2.msra.mxu0 0.0
    %278 = vmatprep.subr.mxu0 0.0
    %279 = vmatpush2.msra.mxu0 0.0
    %280 = vmatprep.subr.mxu0 0.0
    %281 = vmatpush2.msra.mxu0 0.0
    %282 = vmatprep.subr.mxu0 0.0
    %283 = vmatpush2.msra.mxu0 0.0
    %284 = vmatprep.subr.mxu0 0.0
    %285 = vmatpush2.msra.mxu0 0.0
    %286 = vmatprep.subr.mxu0 0.0
    %287 = vmatpush2.msra.mxu0 0.0
    %288 = vmatprep.subr.mxu0 0.0
    %289 = vmatpush2.msra.mxu0 0.0
    %290 = vmatprep.subr.mxu0 0.0
    %291 = vmatpush2.msra.mxu0 0.0
    %292 = vmatprep.subr.mxu0 0.0
    %293 = vmatpush2.msra.mxu0 0.0
    %294 = vmatprep.subr.mxu0 0.0
    %295 = vmatpush2.msra.mxu0 0.0
    %296 = vmatprep.subr.mxu0 0.0
    %297 = vmatpush2.msra.mxu0 0.0
    %298 = vmatprep.mubr.f32.mxu0 0.0
    %299 = vmatmul.mubr.f32.gmra.mxu0 %v229
    %v300 = vpop.f32.mrf.mxu0
    %v301 = vadd.f32 %v233, %v300
    %v302 = vpop.f32.mrf.mxu0
    %303 = vdwg.mxu0
    %vm304 = vcmask 72704
    %305 = vst.msk [vmem:[#allocation7] sm:$0xff] %vm304, %v301
    // Predicated region
    $region18: #{tpu_custom_call.1} parent=1 // pred_check
      _
    $region19: #{tpu_custom_call.1} parent=1 // pred_check_branch
      %307 = sbr.rel (0) target = $region21
    $region20: #{tpu_custom_call.1} parent=1 // pred_region
      %s309 = ssub.s32 128, 128
      %310 = vsyncadd [#allocation4], %s309
      %s312 = sshll.u32 [#allocation7], 4
      %s313 = int_to_ptr.vmem [resolvable:$true] %s312
      %315 = dma.vmem_to_hbm [thread:$0]  %s313, 128, %s2, [#allocation4]
    $region21: #{tpu_custom_call.1} parent=1 // pred_fallthru
      _
    // Predicated region
    $region22: #{tpu_custom_call.1} parent=1 // pred_check
      _
    $region23: #{tpu_custom_call.1} parent=1 // pred_check_branch
      %317 = sbr.rel (0) target = $region25
    $region24: #{tpu_custom_call.1} parent=1 // pred_region
      %318 = dma.done [#allocation4], 128
    $region25: #{tpu_custom_call.1} parent=1 // pred_fallthru
      _
    %319 = vsyncpa [#allocation3], 1
    %320 = vsyncpa [#allocation6], 1
    %321 = vsyncpa [#allocation4], 1

</llo_original>
